<compile_context>
chip_gen: v7x
topology: tpu7x:2x2x1
jax: 0.10.0
libtpu: 0.0.40
codegen_flags: <defaults>
</compile_context>

<pallas_src>
import jax
import jax.numpy as jnp
from jax.experimental import pallas as pl
from jax.experimental.pallas import tpu as pltpu

QUANT_BITS = 8
INTLEN = 3                                   # quant_table[self.name]
FRACLEN = QUANT_BITS - 1 - INTLEN
SCALE = float(2.0 ** FRACLEN)                # exact power of two
INV_SCALE = float(2.0 ** (-FRACLEN))         # exact power of two
QMIN = float(-(2 ** (QUANT_BITS - 1)))       # -128
QMAX = float(2 ** (QUANT_BITS - 1) - 1)      #  127

_MiB = 1024 * 1024


def _round_up(x, m):
    return ((x + m - 1) // m) * m


def _chip_config():
    """Per-generation tile caps and scoped-VMEM limit."""
    try:
        kind = jax.devices()[0].device_kind.lower()
    except Exception:  # pragma: no cover - be robust off-TPU
        kind = ""
    if "7" in kind:
        # v7x: 64 MiB VMEM/TC, ~3.2 TB/s HBM, 2 TensorCores/chip.
        return dict(rb=256, cb=8192, vmem=48 * _MiB, two_tc=True)
    if "v6" in kind or "6e" in kind:
        # v6e: 128 MiB VMEM, ~1.4 TB/s HBM, 1 TensorCore.
        return dict(rb=512, cb=4096, vmem=64 * _MiB, two_tc=False)
    # v5e / conservative default: 128 MiB physical but 16 MiB default scoped.
    return dict(rb=512, cb=2048, vmem=32 * _MiB, two_tc=False)


def _pick_blocks(nc, hw, cfg):
    """(8,128)-aligned blocks, clamped so a block never exceeds the padded array."""
    rb = min(cfg["rb"], _round_up(nc, 8))
    cb = min(cfg["cb"], _round_up(hw, 128))
    # Only force >= 2 grid steps on 2-TensorCore chips (v7x); on single-TC
    # chips splitting a one-block array just adds a pipeline step.
    if cfg["two_tc"] and pl.cdiv(nc, rb) * pl.cdiv(hw, cb) == 1:
        if cb > 128:
            cb = _round_up(pl.cdiv(cb, 2), 128)
        elif rb > 8:
            rb = _round_up(pl.cdiv(rb, 2), 8)
    return rb, cb


def _prelu_quant_kernel(x_ref, alpha_ref, o_ref):
    x = x_ref[...].astype(jnp.float32)

    # --- fake 8-bit fixed-point quantization of the input (pre_hook) ---
    clipped = jnp.clip(jnp.round(x * SCALE), QMIN, QMAX)

    # --- per-channel PReLU fused with the dequant multiply ---
    # alpha_ref is the (rb, 1) slope column for this row block.
    alpha = alpha_ref[...].astype(jnp.float32)
    neg_scale = alpha * INV_SCALE                        # (rb, 1), once per block
    out = clipped * jnp.where(clipped >= 0, INV_SCALE, neg_scale)

    o_ref[...] = out.astype(o_ref.dtype)


@jax.jit
def prelu_quant(x, alpha):
    """x: (N, C, H, W) float32, alpha: (C,) float32  ->  (N, C, H, W)."""
    N, C, H, W = x.shape
    NC, HW = N * C, H * W

    cfg = _chip_config()
    rb, cb = _pick_blocks(NC, HW, cfg)
    grid = (pl.cdiv(NC, rb), pl.cdiv(HW, cb))

    x2 = x.reshape(NC, HW)
    # per-row slope: channel index = row % C
    alpha_col = jnp.tile(alpha, (N,)).reshape(NC, 1)

    out2 = pl.pallas_call(
        _prelu_quant_kernel,
        out_shape=jax.ShapeDtypeStruct((NC, HW), x.dtype),
        grid_spec=pltpu.PrefetchScalarGridSpec(
            num_scalar_prefetch=0,
            grid=grid,
            in_specs=[
                pl.BlockSpec((rb, cb), lambda i, j: (i, j)),
                # Per-block slope column; DMA re-issues only when i changes.
                pl.BlockSpec((rb, 1), lambda i, j: (i, 0)),
            ],
            out_specs=pl.BlockSpec((rb, cb), lambda i, j: (i, j)),
        ),
        compiler_params=pltpu.CompilerParams(
            dimension_semantics=("parallel", "parallel"),
            vmem_limit_bytes=cfg["vmem"],
        ),
    )(x2, alpha_col)

    return out2.reshape(N, C, H, W)


def _reference(x, alpha):
    xq = jnp.clip(jnp.round(x * SCALE), QMIN, QMAX) * INV_SCALE
    a = alpha.reshape(1, -1, 1, 1)
    return jnp.where(xq >= 0, xq, a * xq)


if __name__ == "__main__":
    key = jax.random.PRNGKey(0)
    N, C, H, W = 2, 4, 16, 16
    x = jax.random.normal(key, (N, C, H, W), dtype=jnp.float32) * 2.0
    # nn.PReLU per-channel default init: 0.25 (deterministic).
    alpha = jnp.full((C,), 0.25, dtype=jnp.float32)

    out = prelu_quant(x, alpha)
    jax.block_until_ready(out)

    ref = _reference(x, alpha)
    assert out.shape == (N, C, H, W)
    assert jnp.allclose(out, ref, atol=1e-6, rtol=1e-6)
    print("KERNEL_OK")
</pallas_src>

<mosaic_0001>
module attributes {stable_mosaic.version = 11 : i64} {
  func.func @_prelu_quant_kernel(%arg0: i32, %arg1: i32, %arg2: memref<8x256xf32, #tpu.memory_space<vmem>>, %arg3: memref<8x1xf32, #tpu.memory_space<vmem>>, %arg4: memref<8x256xf32, #tpu.memory_space<vmem>>) attributes {dimension_semantics = [#tpu.dimension_semantics<parallel>, #tpu.dimension_semantics<parallel>], iteration_bounds = array<i64: 1, 1>, scalar_prefetch = 0 : i64, scratch_operands = 0 : i64, tpu.core_type = #tpu.core_type<tc>, window_params = [{transform_indices = @transform_0, window_bounds = array<i64: 8, 256>}, {transform_indices = @transform_1, window_bounds = array<i64: 8, 1>}, {transform_indices = @transform_2, window_bounds = array<i64: 8, 256>}]} {
    %c0 = arith.constant 0 : index
    %c0_0 = arith.constant 0 : index
    %0 = vector.load %arg2[%c0, %c0_0] : memref<8x256xf32, #tpu.memory_space<vmem>>, vector<8x256xf32>
    %cst = arith.constant 1.600000e+01 : f32
    %1 = vector.broadcast %cst : f32 to vector<8x256xf32>
    %2 = arith.mulf %0, %1 : vector<8x256xf32>
    %3 = math.roundeven %2 : vector<8x256xf32>
    %cst_1 = arith.constant -1.280000e+02 : f32
    %cst_2 = arith.constant 1.270000e+02 : f32
    %4 = vector.broadcast %cst_1 : f32 to vector<8x256xf32>
    %5 = arith.maximumf %4, %3 : vector<8x256xf32>
    %6 = vector.broadcast %cst_2 : f32 to vector<8x256xf32>
    %7 = arith.minimumf %6, %5 : vector<8x256xf32>
    %c0_3 = arith.constant 0 : index
    %c0_4 = arith.constant 0 : index
    %8 = vector.load %arg3[%c0_3, %c0_4] : memref<8x1xf32, #tpu.memory_space<vmem>>, vector<8x1xf32>
    %cst_5 = arith.constant 6.250000e-02 : f32
    %9 = vector.broadcast %cst_5 : f32 to vector<8x1xf32>
    %10 = arith.mulf %8, %9 : vector<8x1xf32>
    %cst_6 = arith.constant 0.000000e+00 : f32
    %11 = vector.broadcast %cst_6 : f32 to vector<8x256xf32>
    %12 = arith.cmpf oge, %7, %11 : vector<8x256xf32>
    %cst_7 = arith.constant 6.250000e-02 : f32
    %13 = vector.broadcast %cst_7 : f32 to vector<8x256xf32>
    %14 = vector.shape_cast %10 : vector<8x1xf32> to vector<8x1xf32>
    %15 = vector.broadcast %14 : vector<8x1xf32> to vector<8x256xf32>
    %16 = arith.select %12, %13, %15 : vector<8x256xi1>, vector<8x256xf32>
    %17 = arith.mulf %7, %16 : vector<8x256xf32>
    %c0_8 = arith.constant 0 : index
    %c0_9 = arith.constant 0 : index
    %18 = vector.load %arg4[%c0_8, %c0_9] : memref<8x256xf32, #tpu.memory_space<vmem>>, vector<8x256xf32>
    tpu.vector_store %arg4[%c0_8, %c0_9], %17 {strides = array<i32>} : memref<8x256xf32, #tpu.memory_space<vmem>>, vector<8x256xf32>,
    return
  }
  func.func @transform_0(%arg0: i32, %arg1: i32) -> (i32, i32) {
    %c0_i32 = arith.constant 0 : i32
    return %arg0, %arg1 : i32, i32
  }
  func.func @transform_1(%arg0: i32, %arg1: i32) -> (i32, i32) {
    %c0_i32 = arith.constant 0 : i32
    %c0_i32_0 = arith.constant 0 : i32
    return %arg0, %c0_i32 : i32, i32
  }
  func.func @transform_2(%arg0: i32, %arg1: i32) -> (i32, i32) {
    %c0_i32 = arith.constant 0 : i32
    return %arg0, %arg1 : i32, i32
  }
}

</mosaic_0001>

<llo_original>
// kernel: tile.8
$region0: #{tile.8}
  #allocation0 [shape = 's32[1]{0}', space=sflag, size = 0x4, scoped, tag = 'scoped memory for tile.8']
  %s0 = inlined_call_operand.vmem [shape: f32[4], index: 0, kind: input, shape index: {}]
  %s1 = inlined_call_operand.vmem [shape: f32[2,4], index: 1, kind: output, shape index: {}]
  // Predicated region
  $region2: #{tile.8} parent=0 // pred_check
    _
  $region3: #{tile.8} parent=0 // pred_check_branch
    %3 = sbr.rel (0) target = $region5
  $region4: #{tile.8} parent=0 // pred_region
    _
  $region5: #{tile.8} parent=0 // pred_fallthru
    _
  %v4 = vld [vmem:[%s0] ss:$0 sm:$0xff]
  %5 = vst [vmem:[%s1] sm:$0x3] %v4

// kernel: tile.0
$region0: #{tile.0}
  %s0 = inlined_call_operand.vmem [shape: f32[2,4], index: 0, kind: input, shape index: {}]
  %s1 = inlined_call_operand.vmem [shape: f32[8,1], index: 1, kind: output, shape index: {}]
  $region1: #{tile.0} parent=0
    #allocation0 [shape = 'u8[4096]{0}', space=vmem, size = 0x1000, scoped, tag = 'scoped mem for input reshape']
    %s3 = sshllo.u32 0, 2
    %v4 = vld [vmem:[%s0] sm:%s3]
    %5 = vst [vmem:[#allocation0] sm:%s3] %v4
    %v6 = vld [vmem:[#allocation0] sm:$0x3]
    %vm7 = vcmask 7168
    %8 = vst.msk [vmem:[%s1] ss:$4 sm:$0x3] %vm7, %v6
    %v9 = vld [vmem:[#allocation0] sm:$0x3]
    %10 = vrot.lane.b32.xlu0 %v9, 127
    %v11 = vpop.permute.xlu0 %10
    %vm12 = vcmask 7168
    %s13 = scalar_lea.vmem %s1, 1
    %14 = vst.msk [vmem:[%s13] ss:$4 sm:$0x3] %vm12, %v11
    %v15 = vld [vmem:[#allocation0] sm:$0x3]
    %16 = vrot.lane.b32.xlu0 %v15, 126
    %v17 = vpop.permute.xlu0 %16
    %vm18 = vcmask 7168
    %s19 = scalar_lea.vmem %s1, 2
    %20 = vst.msk [vmem:[%s19] ss:$4 sm:$0x3] %vm18, %v17
    %v21 = vld [vmem:[#allocation0] sm:$0x3]
    %22 = vrot.lane.b32.xlu0 %v21, 125
    %v23 = vpop.permute.xlu0 %22
    %vm24 = vcmask 7168
    %s25 = scalar_lea.vmem %s1, 3
    %26 = vst.msk [vmem:[%s25] ss:$4 sm:$0x3] %vm24, %v23

// kernel: prelu_quant.1
$region0: #{prelu_quant.1}
  #allocation0 [shape = 'u32[]', space=smem, size = 0x4, offset = 0x4, fixed_abs, tag = 'smem constant byte address 0x4 - core index']
  #allocation1 [shape = 'u32[144,128]{1,0:T(1,128)}', space=vmem, size = 0x12000, scoped, tag = 'internal scratch']
  %s0 = inlined_call_operand.vmem [shape: f32[8,256], index: 0, kind: input, shape index: {}]
  %s1 = inlined_call_operand.vmem [shape: f32[8,1], index: 1, kind: input, shape index: {}]
  %s2 = inlined_call_operand.vmem [shape: f32[8,256], index: 2, kind: output, shape index: {}]
  %s3 = sld [smem:[#allocation0]]
  $region18: #{prelu_quant.1} parent=0
    _
  %s5 = ssub.s32 1, %s3
  %s6 = scalar_select 0, %s5, %s3
  // Predicated region
  $region2: #{prelu_quant.1} parent=0 // pred_check
    _
  $region3: #{prelu_quant.1} parent=0 // pred_check_branch
    %8 = sbr.rel (0) target = $region5
  $region4: #{prelu_quant.1} parent=0 // pred_region
    _
  $region5: #{prelu_quant.1} parent=0 // pred_fallthru
    _
  // Predicated region
  $region6: #{prelu_quant.1} parent=0 // pred_check
    _
  $region7: #{prelu_quant.1} parent=0 // pred_check_branch
    %10 = sbr.rel (0) target = $region9
  $region8: #{prelu_quant.1} parent=0 // pred_region
    _
  $region9: #{prelu_quant.1} parent=0 // pred_fallthru
    _
  %v11 = vld [vmem:[%s0] sm:$0xff]
  %v12 = vld [vmem:[%s0 + $0x8] sm:$0xff]
  %v13 = vmul.f32 %v11, 16.0
  %v14 = vmul.f32 %v12, 16.0
  %v15 = vround.ne.pseudo %v13
  %v16 = vround.ne.pseudo %v14
  %v17 = vmax.f32 %v15, -128.0
  %v18 = vmax.f32 %v16, -128.0
  %v19 = vmin.f32 %v17, 127.0
  %v20 = vmin.f32 %v18, 127.0
  %v21 = vld [vmem:[%s1] sm:$0xff]
  %v22 = vmul.f32 %v21, 0.0625
  %vm23 = vcmp.ge.f32.partialorder %v19, 0.0
  %vm24 = vcmp.ge.f32.partialorder %v20, 0.0
  %26 = vset.pattern.permute.xlu0 0
  %27 = vperm.xlu0 %26, %v22
  %v28 = vpop.permute.xlu0 %27
  %v30 = vsel %vm23, 0.0625, %v28
  %v31 = vsel %vm24, 0.0625, %v28
  %v32 = vmul.f32 %v19, %v30
  %v33 = vmul.f32 %v20, %v31
  %34 = vst [vmem:[%s2] sm:$0xff] %v32
  %35 = vst [vmem:[%s2 + $0x8] sm:$0xff] %v33
  // Predicated region
  $region10: #{prelu_quant.1} parent=0 // pred_check
    _
  $region11: #{prelu_quant.1} parent=0 // pred_check_branch
    %37 = sbr.rel (0) target = $region13
  $region12: #{prelu_quant.1} parent=0 // pred_region
    _
  $region13: #{prelu_quant.1} parent=0 // pred_fallthru
    _
  // Predicated region
  $region14: #{prelu_quant.1} parent=0 // pred_check
    _
  $region15: #{prelu_quant.1} parent=0 // pred_check_branch
    %39 = sbr.rel (0) target = $region17
  $region16: #{prelu_quant.1} parent=0 // pred_region
    _
  $region17: #{prelu_quant.1} parent=0 // pred_fallthru
    _

</llo_original>
